<compile_context>
chip_gen: v7x
topology: tpu7x:2x2x1
jax: 0.10.0
libtpu: 0.0.40
codegen_flags: <defaults>
</compile_context>

<pallas_src>
import math
import functools
from typing import NamedTuple

import jax
import jax.numpy as jnp
from jax.experimental import pallas as pl
from jax.experimental.pallas import tpu as pltpu

MIN_NORM = 1e-15


def _round_up(n: int, m: int) -> int:
    return ((n + m - 1) // m) * m


# --------------------------- Pallas kernel -----------------------------------

def _geodesic_kernel(x_ref, pT_ref, aT_ref, stats_ref, o_ref, *, c: float):
    """One (batch tile, out_features tile):
         x (TB, D); pT/aT (D, TO); stats (3, TO); out (TB, TO)."""
    sqrt_c = math.sqrt(c)
    inv_sqrt_c = 1.0 / sqrt_c

    x_in = x_ref[...]                                   # (TB, D) native dtype -> MXU
    pT = pT_ref[...]                                    # (D, TO) bias points (transposed)
    aT = aT_ref[...]                                    # (D, TO) normals     (transposed)

    # --- MXU: the two matmuls that carry all O(B*O*D) work (f32 accumulation) ---
    px = jnp.dot(x_in, pT, preferred_element_type=jnp.float32)   # (TB, TO) <x, bias>
    xa = jnp.dot(x_in, aT, preferred_element_type=jnp.float32)   # (TB, TO) <x, weight>

    x = x_in.astype(jnp.float32)
    x2 = jnp.sum(x * x, axis=-1, keepdims=True)                  # (TB, 1) |x|^2

    # Hoisted, grid-invariant parameter statistics (computed once in the wrapper).
    stats = stats_ref[...].astype(jnp.float32)                   # (3, TO)
    p2 = stats[0:1, :]        # |bias|^2
    pa = stats[1:2, :]        # <bias, weight>
    inv_a = stats[2:3, :]     # 1 / max(|weight|, MIN_NORM)

    # --- Mobius addition  diff = (-bias) (+)_c x  expanded via dot products ---
    #   alpha = 1 - 2c<p,x> + c|x|^2
    #   beta  = 1 - c|p|^2
    #   den_m = 1 - 2c<p,x> + c^2 |p|^2 |x|^2
    #   <diff, a>  = (beta*<x,a> - alpha*<p,a>) / den_m
    #   |diff|^2   = (alpha^2|p|^2 - 2*alpha*beta*<p,x> + beta^2|x|^2) / den_m^2
    alpha = 1.0 - (2.0 * c) * px + c * x2                        # (TB, TO)
    beta = 1.0 - c * p2                                          # (1, TO)
    den_m = jnp.maximum(1.0 - (2.0 * c) * px + (c * c) * (p2 * x2), MIN_NORM)

    s_num = beta * xa - alpha * pa                               # <diff,a> * den_m
    q_num = (alpha * alpha) * p2 - 2.0 * (alpha * beta) * px + (beta * beta) * x2
                                                                 # |diff|^2 * den_m^2

    # z = 2*sqrt(c)*<diff,a> / ((1 - c|diff|^2)*|a|)  consolidated to ONE division:
    #   z = 2*sqrt(c) * s_num * den_m * inv_a / (den_m^2 - c*q_num)
    num = (2.0 * sqrt_c) * s_num * den_m * inv_a
    den = jnp.maximum(den_m * den_m - c * q_num, MIN_NORM)

    # EUP reciprocal + one Newton refinement (~exact f32) instead of VPU divides.
    r = pl.reciprocal(den, approx=True)
    r = r * (2.0 - den * r)
    z = num * r                                                  # signed=True -> no abs

    # Numerically stable, odd arcsinh: sign(z) * log(|z| + sqrt(z^2 + 1)).
    az = jnp.abs(z)
    asinh = jnp.log(az + jnp.sqrt(az * az + 1.0))
    asinh = jnp.where(z < 0.0, -asinh, asinh)

    # weight_norm=False -> no extra *|weight| factor.
    o_ref[...] = (asinh * inv_sqrt_c).astype(o_ref.dtype)


# --------------------------- wrapper / parameter prep ------------------------

class GeodesicParams(NamedTuple):
    pT: jax.Array        # (D, O_pad)  bias points, transposed, lane-padded
    aT: jax.Array        # (D, O_pad)  normals,     transposed, lane-padded
    stats: jax.Array     # (3, O_pad)  [|bias|^2, <bias,weight>, 1/|weight|]
    out_features: int    # un-padded O
    block_o: int         # out_features tile (multiple of 128)


def prepare_params(bias_pt, weight_tan, *, block_o: int = 512) -> GeodesicParams:
    """One-time parameter preparation: (O, D) -> (D, O_pad) + hoisted reductions."""
    O, D = bias_pt.shape
    to = min(block_o, _round_up(O, 128))
    o_pad = _round_up(O, to)

    pT = jnp.transpose(bias_pt)        # (D, O)
    aT = jnp.transpose(weight_tan)     # (D, O)
    if o_pad != O:
        pT = jnp.pad(pT, ((0, 0), (0, o_pad - O)))
        aT = jnp.pad(aT, ((0, 0), (0, o_pad - O)))

    p32 = pT.astype(jnp.float32)
    a32 = aT.astype(jnp.float32)
    p2 = jnp.sum(p32 * p32, axis=0)                                    # (O_pad,)
    pa = jnp.sum(p32 * a32, axis=0)                                    # (O_pad,)
    inv_a = 1.0 / jnp.maximum(jnp.sqrt(jnp.sum(a32 * a32, axis=0)), MIN_NORM)
    stats = jnp.stack([p2, pa, inv_a], axis=0)                         # (3, O_pad)

    return GeodesicParams(pT=pT, aT=aT, stats=stats, out_features=O, block_o=to)


def geodesic_layer(x, params: GeodesicParams, *, c: float = 1.0,
                   block_b: int = 256,
                   vmem_limit_bytes: int = 32 * 1024 * 1024):
    """x: (B, D) points in the Poincare ball; params: from prepare_params()."""
    B, D = x.shape
    assert params.pT.shape[0] == D
    o_pad = params.pT.shape[1]
    to = params.block_o

    tb = min(block_b, _round_up(B, 8))
    b_pad = _round_up(B, tb)
    if b_pad != B:
        x = jnp.pad(x, ((0, b_pad - B), (0, 0)))

    # Grid: out_features tiles (outer) x batch tiles (inner). Parameter index_maps
    # are constant over the inner batch axis -> their tiles are DMA'd once per O tile.
    # (Single-buffering the parameter specs via pipeline_mode would further halve
    #  their VMEM footprint; left out for portability across jax versions.)
    grid = (o_pad // to, b_pad // tb)

    out = pl.pallas_call(
        functools.partial(_geodesic_kernel, c=c),
        out_shape=jax.ShapeDtypeStruct((b_pad, o_pad), jnp.float32),
        grid_spec=pltpu.PrefetchScalarGridSpec(
            num_scalar_prefetch=0,
            grid=grid,
            in_specs=[
                pl.BlockSpec((tb, D), lambda oi, bi: (bi, 0)),   # x
                pl.BlockSpec((D, to), lambda oi, bi: (0, oi)),   # bias^T
                pl.BlockSpec((D, to), lambda oi, bi: (0, oi)),   # weight^T
                pl.BlockSpec((3, to), lambda oi, bi: (0, oi)),   # hoisted stats
            ],
            out_specs=pl.BlockSpec((tb, to), lambda oi, bi: (bi, oi)),
        ),
        compiler_params=pltpu.CompilerParams(
            dimension_semantics=("parallel", "parallel"),
            vmem_limit_bytes=vmem_limit_bytes),
    )(x, params.pT, params.aT, params.stats)

    return out[:B, :params.out_features]


# ----- plain-JAX parameter construction (RiemannianLayer.__init__ semantics) -----
# TODO(synk): torch's kaiming_normal_/uniform_ RNG streams are not reproduced
# bit-exactly; only the distributional init + expmap0/transp0 transforms are.

def make_params(key, in_features: int, out_features: int, c: float = 1.0):
    kw, kb = jax.random.split(key)
    # kaiming_normal_(a=sqrt(5)): gain = sqrt(2/(1+5)), std = gain/sqrt(fan_in)
    std = math.sqrt(2.0 / (1.0 + 5.0)) / math.sqrt(in_features)
    _weight = std * jax.random.normal(kw, (out_features, in_features), jnp.float32)
    bound = 4.0 / math.sqrt(in_features)
    _bias = jax.random.uniform(kb, (out_features, 1), jnp.float32,
                               minval=-bound, maxval=bound)

    # bias property: expmap0(_weight * _bias)
    u = _weight * _bias
    un = jnp.maximum(jnp.linalg.norm(u, axis=-1, keepdims=True), MIN_NORM)
    sqrt_c = math.sqrt(c)
    bias_pt = jnp.tanh(sqrt_c * un) / (sqrt_c * un) * u            # (O, D)

    # weight property: transp0(bias, _weight) = _weight * (1 - c*|bias|^2)
    lam = 1.0 - c * jnp.sum(bias_pt * bias_pt, axis=-1, keepdims=True)
    weight_tan = _weight * lam                                      # (O, D)
    return bias_pt, weight_tan


# ----- pure-JAX reference (direct translation of normdist2plane) -----

def reference(x, bias_pt, weight_tan, c: float = 1.0):
    sqrt_c = math.sqrt(c)
    xe = x[:, None, :]            # (B, 1, D)
    p = bias_pt[None, :, :]       # (1, O, D)
    a = weight_tan[None, :, :]    # (1, O, D)
    mp = -p
    x2 = jnp.sum(xe * xe, -1, keepdims=True)
    p2 = jnp.sum(mp * mp, -1, keepdims=True)
    pxdot = jnp.sum(mp * xe, -1, keepdims=True)
    num = (1 + 2 * c * pxdot + c * x2) * mp + (1 - c * p2) * xe
    den = jnp.maximum(1 + 2 * c * pxdot + c * c * p2 * x2, MIN_NORM)
    diff = num / den
    diff_norm2 = jnp.maximum(jnp.sum(diff * diff, -1), MIN_NORM)
    sc_diff_a = jnp.sum(diff * a, -1)
    a_norm = jnp.maximum(jnp.linalg.norm(a, axis=-1), MIN_NORM)
    z = 2 * sqrt_c * sc_diff_a / jnp.maximum((1 - c * diff_norm2) * a_norm, MIN_NORM)
    return jnp.arcsinh(z) / sqrt_c


if __name__ == "__main__":
    B, D, O = 16, 32, 16   # batch, in_features, out_features
    c = 1.0

    key = jax.random.PRNGKey(0)
    kx, kp = jax.random.split(key)

    # points strictly inside the unit Poincare ball
    raw = jax.random.normal(kx, (B, D), jnp.float32)
    x = 0.5 * raw / (jnp.linalg.norm(raw, axis=-1, keepdims=True) + 1.0)

    bias_pt, weight_tan = make_params(kp, D, O, c=c)

    params = prepare_params(bias_pt, weight_tan)        # one-time (D, O) layout + stats
    out = geodesic_layer(x, params, c=c)
    out = jax.block_until_ready(out)

    ref = reference(x, bias_pt, weight_tan, c=c)
    assert out.shape == (B, O)
    max_err = float(jnp.max(jnp.abs(out - ref)))
    assert jnp.allclose(out, ref, atol=1e-5, rtol=1e-5), max_err

    print("KERNEL_OK")
</pallas_src>

<mosaic_0001>
module attributes {stable_mosaic.version = 11 : i64} {
  func.func @_geodesic_kernel(%arg0: i32, %arg1: i32, %arg2: memref<16x32xf32, #tpu.memory_space<vmem>>, %arg3: memref<32x128xf32, #tpu.memory_space<vmem>>, %arg4: memref<32x128xf32, #tpu.memory_space<vmem>>, %arg5: memref<3x128xf32, #tpu.memory_space<vmem>>, %arg6: memref<16x128xf32, #tpu.memory_space<vmem>>) attributes {dimension_semantics = [#tpu.dimension_semantics<parallel>, #tpu.dimension_semantics<parallel>], iteration_bounds = array<i64: 1, 1>, scalar_prefetch = 0 : i64, scratch_operands = 0 : i64, tpu.core_type = #tpu.core_type<tc>, window_params = [{transform_indices = @transform_0, window_bounds = array<i64: 16, 32>}, {transform_indices = @transform_1, window_bounds = array<i64: 32, 128>}, {transform_indices = @transform_2, window_bounds = array<i64: 32, 128>}, {transform_indices = @transform_3, window_bounds = array<i64: 3, 128>}, {transform_indices = @transform_4, window_bounds = array<i64: 16, 128>}]} {
    %c0 = arith.constant 0 : index
    %c0_0 = arith.constant 0 : index
    %0 = vector.load %arg2[%c0, %c0_0] : memref<16x32xf32, #tpu.memory_space<vmem>>, vector<16x32xf32>
    %c0_1 = arith.constant 0 : index
    %c0_2 = arith.constant 0 : index
    %1 = vector.load %arg3[%c0_1, %c0_2] : memref<32x128xf32, #tpu.memory_space<vmem>>, vector<32x128xf32>
    %c0_3 = arith.constant 0 : index
    %c0_4 = arith.constant 0 : index
    %2 = vector.load %arg4[%c0_3, %c0_4] : memref<32x128xf32, #tpu.memory_space<vmem>>, vector<32x128xf32>
    %cst = arith.constant dense<0.000000e+00> : vector<16x128xf32>
    %3 = tpu.matmul %0, %1, %cst {dimension_numbers = #tpu.dot_dimension_numbers<[1], [0], [0], [1], [0, 0, 1, 1], [], []>} : vector<16x32xf32>, vector<32x128xf32>, vector<16x128xf32> -> vector<16x128xf32>
    %cst_5 = arith.constant dense<0.000000e+00> : vector<16x128xf32>
    %4 = tpu.matmul %0, %2, %cst_5 {dimension_numbers = #tpu.dot_dimension_numbers<[1], [0], [0], [1], [0, 0, 1, 1], [], []>} : vector<16x32xf32>, vector<32x128xf32>, vector<16x128xf32> -> vector<16x128xf32>
    %5 = arith.mulf %0, %0 : vector<16x32xf32>
    %cst_6 = arith.constant dense<0.000000e+00> : vector<16xf32>
    %6 = vector.multi_reduction <add>, %5, %cst_6 [1] : vector<16x32xf32> to vector<16xf32>
    %7 = vector.shape_cast %6 : vector<16xf32> to vector<16x1xf32>
    %c0_7 = arith.constant 0 : index
    %c0_8 = arith.constant 0 : index
    %8 = vector.load %arg5[%c0_7, %c0_8] : memref<3x128xf32, #tpu.memory_space<vmem>>, vector<3x128xf32>
    %9 = vector.extract_strided_slice %8 {offsets = [0, 0], sizes = [1, 128], strides = [1, 1]} : vector<3x128xf32> to vector<1x128xf32>
    %10 = vector.extract_strided_slice %8 {offsets = [1, 0], sizes = [1, 128], strides = [1, 1]} : vector<3x128xf32> to vector<1x128xf32>
    %11 = vector.extract_strided_slice %8 {offsets = [2, 0], sizes = [1, 128], strides = [1, 1]} : vector<3x128xf32> to vector<1x128xf32>
    %cst_9 = arith.constant 2.000000e+00 : f32
    %12 = vector.broadcast %cst_9 : f32 to vector<16x128xf32>
    %13 = arith.mulf %12, %3 : vector<16x128xf32>
    %cst_10 = arith.constant 1.000000e+00 : f32
    %14 = vector.broadcast %cst_10 : f32 to vector<16x128xf32>
    %15 = arith.subf %14, %13 : vector<16x128xf32>
    %cst_11 = arith.constant 1.000000e+00 : f32
    %16 = vector.broadcast %cst_11 : f32 to vector<16x1xf32>
    %17 = arith.mulf %16, %7 : vector<16x1xf32>
    %18 = vector.broadcast %17 : vector<16x1xf32> to vector<16x128xf32>
    %19 = arith.addf %15, %18 : vector<16x128xf32>
    %cst_12 = arith.constant 1.000000e+00 : f32
    %20 = vector.broadcast %cst_12 : f32 to vector<1x128xf32>
    %21 = arith.mulf %20, %9 : vector<1x128xf32>
    %cst_13 = arith.constant 1.000000e+00 : f32
    %22 = vector.broadcast %cst_13 : f32 to vector<1x128xf32>
    %23 = arith.subf %22, %21 : vector<1x128xf32>
    %cst_14 = arith.constant 2.000000e+00 : f32
    %24 = vector.broadcast %cst_14 : f32 to vector<16x128xf32>
    %25 = arith.mulf %24, %3 : vector<16x128xf32>
    %cst_15 = arith.constant 1.000000e+00 : f32
    %26 = vector.broadcast %cst_15 : f32 to vector<16x128xf32>
    %27 = arith.subf %26, %25 : vector<16x128xf32>
    %28 = vector.broadcast %9 : vector<1x128xf32> to vector<16x128xf32>
    %29 = vector.broadcast %7 : vector<16x1xf32> to vector<16x128xf32>
    %30 = arith.mulf %28, %29 : vector<16x128xf32>
    %cst_16 = arith.constant 1.000000e+00 : f32
    %31 = vector.broadcast %cst_16 : f32 to vector<16x128xf32>
    %32 = arith.mulf %31, %30 : vector<16x128xf32>
    %33 = arith.addf %27, %32 : vector<16x128xf32>
    %cst_17 = arith.constant 1.000000e-15 : f32
    %34 = vector.broadcast %cst_17 : f32 to vector<16x128xf32>
    %35 = arith.maximumf %33, %34 : vector<16x128xf32>
    %36 = vector.broadcast %23 : vector<1x128xf32> to vector<16x128xf32>
    %37 = arith.mulf %36, %4 : vector<16x128xf32>
    %38 = vector.broadcast %10 : vector<1x128xf32> to vector<16x128xf32>
    %39 = arith.mulf %19, %38 : vector<16x128xf32>
    %40 = arith.subf %37, %39 : vector<16x128xf32>
    %41 = arith.mulf %19, %19 : vector<16x128xf32>
    %42 = vector.broadcast %9 : vector<1x128xf32> to vector<16x128xf32>
    %43 = arith.mulf %41, %42 : vector<16x128xf32>
    %44 = vector.broadcast %23 : vector<1x128xf32> to vector<16x128xf32>
    %45 = arith.mulf %19, %44 : vector<16x128xf32>
    %cst_18 = arith.constant 2.000000e+00 : f32
    %46 = vector.broadcast %cst_18 : f32 to vector<16x128xf32>
    %47 = arith.mulf %46, %45 : vector<16x128xf32>
    %48 = arith.mulf %47, %3 : vector<16x128xf32>
    %49 = arith.subf %43, %48 : vector<16x128xf32>
    %50 = arith.mulf %23, %23 : vector<1x128xf32>
    %51 = vector.broadcast %50 : vector<1x128xf32> to vector<16x128xf32>
    %52 = vector.broadcast %7 : vector<16x1xf32> to vector<16x128xf32>
    %53 = arith.mulf %51, %52 : vector<16x128xf32>
    %54 = arith.addf %49, %53 : vector<16x128xf32>
    %cst_19 = arith.constant 2.000000e+00 : f32
    %55 = vector.broadcast %cst_19 : f32 to vector<16x128xf32>
    %56 = arith.mulf %55, %40 : vector<16x128xf32>
    %57 = arith.mulf %56, %35 : vector<16x128xf32>
    %58 = vector.broadcast %11 : vector<1x128xf32> to vector<16x128xf32>
    %59 = arith.mulf %57, %58 : vector<16x128xf32>
    %60 = arith.mulf %35, %35 : vector<16x128xf32>
    %cst_20 = arith.constant 1.000000e+00 : f32
    %61 = vector.broadcast %cst_20 : f32 to vector<16x128xf32>
    %62 = arith.mulf %61, %54 : vector<16x128xf32>
    %63 = arith.subf %60, %62 : vector<16x128xf32>
    %cst_21 = arith.constant 1.000000e-15 : f32
    %64 = vector.broadcast %cst_21 : f32 to vector<16x128xf32>
    %65 = arith.maximumf %63, %64 : vector<16x128xf32>
    %66 = tpu.reciprocal %65 {approx = true} : vector<16x128xf32> -> vector<16x128xf32>
    %67 = arith.mulf %65, %66 : vector<16x128xf32>
    %cst_22 = arith.constant 2.000000e+00 : f32
    %68 = vector.broadcast %cst_22 : f32 to vector<16x128xf32>
    %69 = arith.subf %68, %67 : vector<16x128xf32>
    %70 = arith.mulf %66, %69 : vector<16x128xf32>
    %71 = arith.mulf %59, %70 : vector<16x128xf32>
    %72 = math.absf %71 : vector<16x128xf32>
    %73 = arith.mulf %72, %72 : vector<16x128xf32>
    %cst_23 = arith.constant 1.000000e+00 : f32
    %74 = vector.broadcast %cst_23 : f32 to vector<16x128xf32>
    %75 = arith.addf %73, %74 : vector<16x128xf32>
    %76 = math.sqrt %75 : vector<16x128xf32>
    %77 = arith.addf %72, %76 : vector<16x128xf32>
    %78 = math.log %77 : vector<16x128xf32>
    %cst_24 = arith.constant 0.000000e+00 : f32
    %79 = vector.broadcast %cst_24 : f32 to vector<16x128xf32>
    %80 = arith.cmpf olt, %71, %79 : vector<16x128xf32>
    %cst_25 = arith.constant 0.000000e+00 : f32
    %81 = vector.broadcast %cst_25 : f32 to vector<16x128xf32>
    %82 = arith.subf %81, %78 : vector<16x128xf32>
    %83 = arith.select %80, %82, %78 : vector<16x128xi1>, vector<16x128xf32>
    %cst_26 = arith.constant 1.000000e+00 : f32
    %84 = vector.broadcast %cst_26 : f32 to vector<16x128xf32>
    %85 = arith.mulf %83, %84 : vector<16x128xf32>
    %c0_27 = arith.constant 0 : index
    %c0_28 = arith.constant 0 : index
    %86 = vector.load %arg6[%c0_27, %c0_28] : memref<16x128xf32, #tpu.memory_space<vmem>>, vector<16x128xf32>
    tpu.vector_store %arg6[%c0_27, %c0_28], %85 {strides = array<i32>} : memref<16x128xf32, #tpu.memory_space<vmem>>, vector<16x128xf32>,
    return
  }
  func.func @transform_0(%arg0: i32, %arg1: i32) -> (i32, i32) {
    %c0_i32 = arith.constant 0 : i32
    %c0_i32_0 = arith.constant 0 : i32
    return %arg1, %c0_i32 : i32, i32
  }
  func.func @transform_1(%arg0: i32, %arg1: i32) -> (i32, i32) {
    %c0_i32 = arith.constant 0 : i32
    %c0_i32_0 = arith.constant 0 : i32
    return %c0_i32, %arg0 : i32, i32
  }
  func.func @transform_2(%arg0: i32, %arg1: i32) -> (i32, i32) {
    %c0_i32 = arith.constant 0 : i32
    %c0_i32_0 = arith.constant 0 : i32
    return %c0_i32, %arg0 : i32, i32
  }
  func.func @transform_3(%arg0: i32, %arg1: i32) -> (i32, i32) {
    %c0_i32 = arith.constant 0 : i32
    %c0_i32_0 = arith.constant 0 : i32
    return %c0_i32, %arg0 : i32, i32
  }
  func.func @transform_4(%arg0: i32, %arg1: i32) -> (i32, i32) {
    %c0_i32 = arith.constant 0 : i32
    return %arg1, %arg0 : i32, i32
  }
}

</mosaic_0001>

<llo_original>
// kernel: tpu_custom_call.1
$region0: #{tpu_custom_call.1}
  #allocation0 [shape = 'u32[]', space=smem, size = 0x4, offset = 0x4, fixed_abs, tag = 'smem constant byte address 0x4 - core index']
  #allocation1 [shape = 'u32[144,128]{1,0:T(1,128)}', space=vmem, size = 0x12000, scoped, tag = 'internal scratch']
  %s0 = inlined_call_operand.hbm [shape: f32[16,32], index: 0, kind: input, shape index: {}]
  %s1 = inlined_call_operand.hbm [shape: f32[32,128], index: 1, kind: input, shape index: {}]
  %s2 = inlined_call_operand.hbm [shape: f32[32,128], index: 2, kind: input, shape index: {}]
  %s3 = inlined_call_operand.vmem [shape: f32[3,128], index: 3, kind: input, shape index: {}]
  %s4 = inlined_call_operand.hbm [shape: f32[16,128], index: 4, kind: output, shape index: {}]
  %s5 = sld [smem:[#allocation0]]
  $region38: #{tpu_custom_call.1} parent=0
    _
  %s7 = ssub.s32 1, %s5
  %s8 = scalar_select 0, %s7, %s5
  $region1: #{tpu_custom_call.1} parent=0
    #allocation2 [shape = 'u8[8192]{0}', space=vmem, size = 0x2000, scoped, tag = 'input window, operand 0, single buffered']
    #allocation3 [shape = 's32[1]{0}', space=sflag, size = 0x4, scoped, tag = 'scoped memory for tpu_custom_call.1']
    #allocation4 [shape = 's32[1]{0}', space=sflag, size = 0x4, scoped, tag = 'scoped memory for tpu_custom_call.1']
    #allocation5 [shape = 'u8[16384]{0}', space=vmem, size = 0x4000, scoped, tag = 'input window, operand 1, single buffered']
    #allocation6 [shape = 's32[1]{0}', space=sflag, size = 0x4, scoped, tag = 'scoped memory for tpu_custom_call.1']
    #allocation7 [shape = 'u8[16384]{0}', space=vmem, size = 0x4000, scoped, tag = 'input window, operand 2, single buffered']
    #allocation8 [shape = 'u8[8192]{0}', space=vmem, size = 0x2000, scoped, tag = 'output window, operand 0, single buffered']
    %9 = vsyncpa [#allocation3], 0
    %10 = vsyncpa [#allocation6], 0
    %11 = vsyncpa [#allocation4], 0
    // Predicated region
    $region2: #{tpu_custom_call.1} parent=1 // pred_check
      _
    $region3: #{tpu_custom_call.1} parent=1 // pred_check_branch
      %13 = sbr.rel (0) target = $region5
    $region4: #{tpu_custom_call.1} parent=1 // pred_region
      %s15 = ssub.s32 256, 256
      %16 = vsyncadd [#allocation3], %s15
      %s17 = sshll.u32 [#allocation2], 4
      %s18 = int_to_ptr.vmem [resolvable:$true] %s17
      %23 = dma.hbm_to_vmem [thread:$0]  %s0, 256, %s18, [#allocation3], 128, 128, 8
    $region5: #{tpu_custom_call.1} parent=1 // pred_fallthru
      _
    // Predicated region
    $region6: #{tpu_custom_call.1} parent=1 // pred_check
      _
    $region7: #{tpu_custom_call.1} parent=1 // pred_check_branch
      %25 = sbr.rel (0) target = $region9
    $region8: #{tpu_custom_call.1} parent=1 // pred_region
      %s27 = ssub.s32 512, 512
      %28 = vsyncadd [#allocation6], %s27
      %s29 = sshll.u32 [#allocation5], 4
      %s30 = int_to_ptr.vmem [resolvable:$true] %s29
      %35 = dma.hbm_to_vmem [thread:$0]  %s1, 512, %s30, [#allocation6], 128, 128, 8
    $region9: #{tpu_custom_call.1} parent=1 // pred_fallthru
      _
    // Predicated region
    $region10: #{tpu_custom_call.1} parent=1 // pred_check
      _
    $region11: #{tpu_custom_call.1} parent=1 // pred_check_branch
      %37 = sbr.rel (0) target = $region13
    $region12: #{tpu_custom_call.1} parent=1 // pred_region
      %s39 = ssub.s32 512, 512
      %40 = vsyncadd [#allocation6], %s39
      %s41 = sshll.u32 [#allocation7], 4
      %s42 = int_to_ptr.vmem [resolvable:$true] %s41
      %47 = dma.hbm_to_vmem [thread:$0]  %s2, 512, %s42, [#allocation6], 128, 128, 8
    $region13: #{tpu_custom_call.1} parent=1 // pred_fallthru
      _
    // Predicated region
    $region14: #{tpu_custom_call.1} parent=1 // pred_check
      _
    $region15: #{tpu_custom_call.1} parent=1 // pred_check_branch
      %49 = sbr.rel (0) target = $region17
    $region16: #{tpu_custom_call.1} parent=1 // pred_region
      _
    $region17: #{tpu_custom_call.1} parent=1 // pred_fallthru
      _
    // Predicated region
    $region18: #{tpu_custom_call.1} parent=1 // pred_check
      _
    $region19: #{tpu_custom_call.1} parent=1 // pred_check_branch
      %51 = sbr.rel (0) target = $region21
    $region20: #{tpu_custom_call.1} parent=1 // pred_region
      %52 = dma.done [#allocation3], 256
    $region21: #{tpu_custom_call.1} parent=1 // pred_fallthru
      _
    // Predicated region
    $region22: #{tpu_custom_call.1} parent=1 // pred_check
      _
    $region23: #{tpu_custom_call.1} parent=1 // pred_check_branch
      %54 = sbr.rel (0) target = $region25
    $region24: #{tpu_custom_call.1} parent=1 // pred_region
      %55 = dma.done [#allocation6], 512
    $region25: #{tpu_custom_call.1} parent=1 // pred_fallthru
      _
    // Predicated region
    $region26: #{tpu_custom_call.1} parent=1 // pred_check
      _
    $region27: #{tpu_custom_call.1} parent=1 // pred_check_branch
      %57 = sbr.rel (0) target = $region29
    $region28: #{tpu_custom_call.1} parent=1 // pred_region
      %58 = dma.done [#allocation6], 512
    $region29: #{tpu_custom_call.1} parent=1 // pred_fallthru
      _
    %v59 = vld [vmem:[#allocation2] sm:$0xff]
    %v60 = vld [vmem:[#allocation2 + $0x8] sm:$0xff]
    %v61 = vld [vmem:[#allocation5] sm:$0xff]
    %v62 = vld [vmem:[#allocation5 + $0x8] sm:$0xff]
    %v63 = vld [vmem:[#allocation5 + $0x10] sm:$0xff]
    %v64 = vld [vmem:[#allocation5 + $0x18] sm:$0xff]
    %v65 = vld [vmem:[#allocation7] sm:$0xff]
    %v66 = vld [vmem:[#allocation7 + $0x8] sm:$0xff]
    %v67 = vld [vmem:[#allocation7 + $0x10] sm:$0xff]
    %v68 = vld [vmem:[#allocation7 + $0x18] sm:$0xff]
    %vm69 = vcmask 261120
    %v71 = vsel %vm69, %v59, 0
    %v74 = vsel %vm69, %v60, 0
    %76 = vmatprep.subr.mxu0 0.0
    %77 = vmatpush1.msra.mxu0 %v61
    %78 = vmatprep.subr.mxu0 0.0
    %79 = vmatpush1.msra.mxu0 %v62
    %80 = vmatprep.subr.mxu0 0.0
    %81 = vmatpush1.msra.mxu0 %v63
    %82 = vmatprep.subr.mxu0 0.0
    %83 = vmatpush1.msra.mxu0 %v64
    %84 = vmatprep.subr.mxu0 0.0
    %85 = vmatpush1.msra.mxu0 0.0
    %86 = vmatprep.subr.mxu0 0.0
    %87 = vmatpush1.msra.mxu0 0.0
    %88 = vmatprep.subr.mxu0 0.0
    %89 = vmatpush1.msra.mxu0 0.0
    %90 = vmatprep.subr.mxu0 0.0
    %91 = vmatpush1.msra.mxu0 0.0
    %92 = vmatprep.subr.mxu0 0.0
    %93 = vmatpush1.msra.mxu0 0.0
    %94 = vmatprep.subr.mxu0 0.0
    %95 = vmatpush1.msra.mxu0 0.0
    %96 = vmatprep.subr.mxu0 0.0
    %97 = vmatpush1.msra.mxu0 0.0
    %98 = vmatprep.subr.mxu0 0.0
    %99 = vmatpush1.msra.mxu0 0.0
    %100 = vmatprep.subr.mxu0 0.0
    %101 = vmatpush1.msra.mxu0 0.0
    %102 = vmatprep.subr.mxu0 0.0
    %103 = vmatpush1.msra.mxu0 0.0
    %104 = vmatprep.subr.mxu0 0.0
    %105 = vmatpush1.msra.mxu0 0.0
    %106 = vmatprep.subr.mxu0 0.0
    %107 = vmatpush1.msra.mxu0 0.0
    %108 = vmatprep.subr.mxu0 0.0
    %109 = vmatpush1.msra.mxu0 0.0
    %110 = vmatprep.subr.mxu0 0.0
    %111 = vmatpush1.msra.mxu0 0.0
    %112 = vmatprep.subr.mxu0 0.0
    %113 = vmatpush1.msra.mxu0 0.0
    %114 = vmatprep.subr.mxu0 0.0
    %115 = vmatpush1.msra.mxu0 0.0
    %116 = vmatprep.subr.mxu0 0.0
    %117 = vmatpush1.msra.mxu0 0.0
    %118 = vmatprep.subr.mxu0 0.0
    %119 = vmatpush1.msra.mxu0 0.0
    %120 = vmatprep.subr.mxu0 0.0
    %121 = vmatpush1.msra.mxu0 0.0
    %122 = vmatprep.subr.mxu0 0.0
    %123 = vmatpush1.msra.mxu0 0.0
    %124 = vmatprep.subr.mxu0 0.0
    %125 = vmatpush1.msra.mxu0 0.0
    %126 = vmatprep.subr.mxu0 0.0
    %127 = vmatpush1.msra.mxu0 0.0
    %128 = vmatprep.subr.mxu0 0.0
    %129 = vmatpush1.msra.mxu0 0.0
    %130 = vmatprep.subr.mxu0 0.0
    %131 = vmatpush1.msra.mxu0 0.0
    %132 = vmatprep.subr.mxu0 0.0
    %133 = vmatpush1.msra.mxu0 0.0
    %134 = vmatprep.subr.mxu0 0.0
    %135 = vmatpush1.msra.mxu0 0.0
    %136 = vmatprep.subr.mxu0 0.0
    %137 = vmatpush1.msra.mxu0 0.0
    %138 = vmatprep.subr.mxu0 0.0
    %139 = vmatpush1.msra.mxu0 0.0
    %140 = vmatprep.mubr.f32.mxu0 0.0
    %141 = vmatmul.mubr.f32.gmra.mrb[0].mxu0 %v71
    %v142 = vpop.f32.mrb[0].mxu0
    %v143 = vadd.f32 0.0, %v142
    %v144 = vpop.f32.mrb[0].mxu0
    %145 = vmatprep.mubr.f32.mxu0 0.0
    %146 = vmatmul.mubr.f32.gmra.mrb[0].mxu0 %v74
    %v147 = vpop.f32.mrb[0].mxu0
    %v148 = vadd.f32 0.0, %v147
    %v149 = vpop.f32.mrb[0].mxu0
    %150 = vdwg.mxu0
    %151 = vmatprep.subr.mxu0 0.0
    %152 = vmatpush1.msra.mxu0 %v65
    %153 = vmatprep.subr.mxu0 0.0
    %154 = vmatpush1.msra.mxu0 %v66
    %155 = vmatprep.subr.mxu0 0.0
    %156 = vmatpush1.msra.mxu0 %v67
    %157 = vmatprep.subr.mxu0 0.0
    %158 = vmatpush1.msra.mxu0 %v68
    %159 = vmatprep.subr.mxu0 0.0
    %160 = vmatpush1.msra.mxu0 0.0
    %161 = vmatprep.subr.mxu0 0.0
    %162 = vmatpush1.msra.mxu0 0.0
    %163 = vmatprep.subr.mxu0 0.0
    %164 = vmatpush1.msra.mxu0 0.0
    %165 = vmatprep.subr.mxu0 0.0
    %166 = vmatpush1.msra.mxu0 0.0
    %167 = vmatprep.subr.mxu0 0.0
    %168 = vmatpush1.msra.mxu0 0.0
    %169 = vmatprep.subr.mxu0 0.0
    %170 = vmatpush1.msra.mxu0 0.0
    %171 = vmatprep.subr.mxu0 0.0
    %172 = vmatpush1.msra.mxu0 0.0
    %173 = vmatprep.subr.mxu0 0.0
    %174 = vmatpush1.msra.mxu0 0.0
    %175 = vmatprep.subr.mxu0 0.0
    %176 = vmatpush1.msra.mxu0 0.0
    %177 = vmatprep.subr.mxu0 0.0
    %178 = vmatpush1.msra.mxu0 0.0
    %179 = vmatprep.subr.mxu0 0.0
    %180 = vmatpush1.msra.mxu0 0.0
    %181 = vmatprep.subr.mxu0 0.0
    %182 = vmatpush1.msra.mxu0 0.0
    %183 = vmatprep.subr.mxu0 0.0
    %184 = vmatpush1.msra.mxu0 0.0
    %185 = vmatprep.subr.mxu0 0.0
    %186 = vmatpush1.msra.mxu0 0.0
    %187 = vmatprep.subr.mxu0 0.0
    %188 = vmatpush1.msra.mxu0 0.0
    %189 = vmatprep.subr.mxu0 0.0
    %190 = vmatpush1.msra.mxu0 0.0
    %191 = vmatprep.subr.mxu0 0.0
    %192 = vmatpush1.msra.mxu0 0.0
    %193 = vmatprep.subr.mxu0 0.0
    %194 = vmatpush1.msra.mxu0 0.0
    %195 = vmatprep.subr.mxu0 0.0
    %196 = vmatpush1.msra.mxu0 0.0
    %197 = vmatprep.subr.mxu0 0.0
    %198 = vmatpush1.msra.mxu0 0.0
    %199 = vmatprep.subr.mxu0 0.0
    %200 = vmatpush1.msra.mxu0 0.0
    %201 = vmatprep.subr.mxu0 0.0
    %202 = vmatpush1.msra.mxu0 0.0
    %203 = vmatprep.subr.mxu0 0.0
    %204 = vmatpush1.msra.mxu0 0.0
    %205 = vmatprep.subr.mxu0 0.0
    %206 = vmatpush1.msra.mxu0 0.0
    %207 = vmatprep.subr.mxu0 0.0
    %208 = vmatpush1.msra.mxu0 0.0
    %209 = vmatprep.subr.mxu0 0.0
    %210 = vmatpush1.msra.mxu0 0.0
    %211 = vmatprep.subr.mxu0 0.0
    %212 = vmatpush1.msra.mxu0 0.0
    %213 = vmatprep.subr.mxu0 0.0
    %214 = vmatpush1.msra.mxu0 0.0
    %215 = vmatprep.mubr.f32.mxu0 0.0
    %216 = vmatmul.mubr.f32.gmra.mrb[0].mxu0 %v71
    %v217 = vpop.f32.mrb[0].mxu0
    %v218 = vadd.f32 0.0, %v217
    %v219 = vpop.f32.mrb[0].mxu0
    %220 = vmatprep.mubr.f32.mxu0 0.0
    %221 = vmatmul.mubr.f32.gmra.mrb[0].mxu0 %v74
    %v222 = vpop.f32.mrb[0].mxu0
    %v223 = vadd.f32 0.0, %v222
    %v224 = vpop.f32.mrb[0].mxu0
    %225 = vdwg.mxu0
    %v226 = vmul.f32 %v59, %v59
    %v227 = vmul.f32 %v60, %v60
    %v228 = vsel %vm69, %v226, 0.0
    %229 = vadd.xlane.f32.xlu0 %v228
    %v230 = vpop.xlane.xlu0 %229
    %v231 = vsel %vm69, %v227, 0.0
    %232 = vadd.xlane.f32.xlu0 %v231
    %v233 = vpop.xlane.xlu0 %232
    %v234 = vld [vmem:[%s3] sm:$0x7]
    %v235 = vmul.f32 %v143, 2.0
    %v236 = vmul.f32 %v148, 2.0
    %v237 = vsub.f32 1.0, %v235
    %v238 = vsub.f32 1.0, %v236
    %v239 = vadd.f32 %v237, %v230
    %v240 = vadd.f32 %v238, %v233
    %v241 = vsub.f32 1.0, %v234
    %v242 = vlaneseq
    %v243 = vshrl.u32 %v242, 7
    %v244 = vsub.s32 0, %v243
    %v245 = vrot.slane %v234, %v244
    %v246 = vmul.f32 %v245, %v230
    %v247 = vmul.f32 %v245, %v233
    %v248 = vadd.f32 %v237, %v246
    %v249 = vadd.f32 %v238, %v247
    %v250 = vmax.f32 %v248, 1e-15
    %v251 = vmax.f32 %v249, 1e-15
    %v252 = vlaneseq
    %v253 = vshrl.u32 %v252, 7
    %v254 = vsub.s32 0, %v253
    %v255 = vrot.slane %v241, %v254
    %v256 = vmul.f32 %v255, %v218
    %v257 = vmul.f32 %v255, %v223
    %v258 = vlaneseq
    %v259 = vshrl.u32 %v258, 7
    %v260 = vsub.s32 1, %v259
    %v261 = vrot.slane %v234, %v260
    %v262 = vmul.f32 %v239, %v261
    %v263 = vmul.f32 %v240, %v261
    %v264 = vsub.f32 %v256, %v262
    %v265 = vsub.f32 %v257, %v263
    %v266 = vmul.f32 %v239, %v239
    %v267 = vmul.f32 %v240, %v240
    %v268 = vmul.f32 %v266, %v245
    %v269 = vmul.f32 %v267, %v245
    %v270 = vmul.f32 %v239, %v255
    %v271 = vmul.f32 %v240, %v255
    %v272 = vmul.f32 %v270, 2.0
    %v273 = vmul.f32 %v271, 2.0
    %v274 = vmul.f32 %v272, %v143
    %v275 = vmul.f32 %v273, %v148
    %v276 = vsub.f32 %v268, %v274
    %v277 = vsub.f32 %v269, %v275
    %v278 = vmul.f32 %v241, %v241
    %v279 = vlaneseq
    %v280 = vshrl.u32 %v279, 7
    %v281 = vsub.s32 0, %v280
    %v282 = vrot.slane %v278, %v281
    %v283 = vmul.f32 %v282, %v230
    %v284 = vmul.f32 %v282, %v233
    %v285 = vadd.f32 %v276, %v283
    %v286 = vadd.f32 %v277, %v284
    %v287 = vmul.f32 %v264, 2.0
    %v288 = vmul.f32 %v265, 2.0
    %v289 = vmul.f32 %v287, %v250
    %v290 = vmul.f32 %v288, %v251
    %v291 = vlaneseq
    %v292 = vshrl.u32 %v291, 7
    %v293 = vsub.s32 2, %v292
    %v294 = vrot.slane %v234, %v293
    %v295 = vmul.f32 %v289, %v294
    %v296 = vmul.f32 %v290, %v294
    %v297 = vmul.f32 %v250, %v250
    %v298 = vmul.f32 %v251, %v251
    %v299 = vsub.f32 %v297, %v285
    %v300 = vsub.f32 %v298, %v286
    %v301 = vmax.f32 %v299, 1e-15
    %v302 = vmax.f32 %v300, 1e-15
    %v303 = vrcp.pop %v301
    %v304 = vrcp.pop %v302
    %v305 = vmul.f32 %v301, %v303
    %v306 = vmul.f32 %v302, %v304
    %v307 = vsub.f32 2.0, %v305
    %v308 = vsub.f32 2.0, %v306
    %v309 = vmul.f32 %v303, %v307
    %v310 = vmul.f32 %v304, %v308
    %v311 = vmul.f32 %v295, %v309
    %v312 = vmul.f32 %v296, %v310
    %v313 = vand.u32 2147483647, %v311
    %v314 = vand.u32 2147483647, %v312
    %v315 = vmul.f32 %v313, %v313
    %v316 = vmul.f32 %v314, %v314
    %v317 = vadd.f32 %v315, 1.0
    %v318 = vadd.f32 %v316, 1.0
    %v319 = vrsqrt.pop %v317
    %v320 = vmul.f32 %v317, %v319
    %vm321 = vcmp.eq.f32.partialorder %v317, inf
    %v322 = vsel %vm321, %v317, %v320
    %vm323 = vcmp.eq.f32.partialorder %v317, 0.0
    %v324 = vand.u32 %v317, 2147483648
    %v325 = vsel %vm323, %v324, %v322
    %v326 = vrsqrt.pop %v318
    %v327 = vmul.f32 %v318, %v326
    %vm328 = vcmp.eq.f32.partialorder %v318, inf
    %v329 = vsel %vm328, %v318, %v327
    %vm330 = vcmp.eq.f32.partialorder %v318, 0.0
    %v331 = vand.u32 %v318, 2147483648
    %v332 = vsel %vm330, %v331, %v329
    %v333 = vadd.f32 %v313, %v325
    %v334 = vadd.f32 %v314, %v332
    %v335 = vlog2.pop %v333
    %v336 = vmul.f32 %v335, 0.6931472
    %v337 = vlog2.pop %v334
    %v338 = vmul.f32 %v337, 0.6931472
    %vm339 = vcmp.lt.f32.partialorder %v311, 0.0
    %vm340 = vcmp.lt.f32.partialorder %v312, 0.0
    %v341 = vsub.f32 0.0, %v336
    %v342 = vsub.f32 0.0, %v338
    %v343 = vsel %vm339, %v341, %v336
    %v344 = vsel %vm340, %v342, %v338
    %345 = vst [vmem:[#allocation8] sm:$0xff] %v343
    %346 = vst [vmem:[#allocation8 + $0x8] sm:$0xff] %v344
    // Predicated region
    $region30: #{tpu_custom_call.1} parent=1 // pred_check
      _
    $region31: #{tpu_custom_call.1} parent=1 // pred_check_branch
      %348 = sbr.rel (0) target = $region33
    $region32: #{tpu_custom_call.1} parent=1 // pred_region
      %s350 = ssub.s32 256, 256
      %351 = vsyncadd [#allocation4], %s350
      %s352 = sshll.u32 [#allocation8], 4
      %s353 = int_to_ptr.vmem [resolvable:$true] %s352
      %358 = dma.vmem_to_hbm [thread:$0]  %s353, 256, %s4, [#allocation4], 128, 128, 8
    $region33: #{tpu_custom_call.1} parent=1 // pred_fallthru
      _
    // Predicated region
    $region34: #{tpu_custom_call.1} parent=1 // pred_check
      _
    $region35: #{tpu_custom_call.1} parent=1 // pred_check_branch
      %360 = sbr.rel (0) target = $region37
    $region36: #{tpu_custom_call.1} parent=1 // pred_region
      %361 = dma.done [#allocation4], 256
    $region37: #{tpu_custom_call.1} parent=1 // pred_fallthru
      _
    %362 = vsyncpa [#allocation3], 1
    %363 = vsyncpa [#allocation6], 1
    %364 = vsyncpa [#allocation4], 1

</llo_original>
